<compile_context>
chip_gen: v5e
topology: v5e:2x2
jax: 0.10.0
libtpu: 0.0.40
codegen_flags: <defaults>
</compile_context>

<pallas_src>
import functools

import jax
import jax.numpy as jnp
from jax.experimental import pallas as pl
from jax.experimental.pallas import tpu as pltpu


def _round_up(n, m):
    return ((n + m - 1) // m) * m


def critic_kernel(x_ref, w1_ref, b1_ref, w2_ref, b2_ref, w3_ref, b3_ref, o_ref):
    # fc1 + relu.  x arrives as f32; the bf16 cast is cheap VPU work hidden
    # under the MXU, so the wrapper never spends an extra HBM pass on it.
    x = x_ref[...].astype(jnp.bfloat16)
    h1 = jnp.dot(x, w1_ref[...], preferred_element_type=jnp.float32)
    h1 = jnp.maximum(h1 + b1_ref[...], 0.0)

    # fc2 + relu (+ dropout == identity in eval mode).
    h2 = jnp.dot(h1.astype(jnp.bfloat16), w2_ref[...],
                 preferred_element_type=jnp.float32)
    h2 = jnp.maximum(h2 + b2_ref[...], 0.0)

    # Value head: (1, hid) . (TB, hid)^T -> (1, TB).  Emitting a lane-dense row
    # (last dim = TB, a multiple of 128) keeps the output store an unmasked vst
    # instead of the width-1 masked store a (TB, 1) tile would force.
    v = jax.lax.dot_general(
        w3_ref[...], h2.astype(jnp.bfloat16),
        dimension_numbers=(((1,), (1,)), ((), ())),
        preferred_element_type=jnp.float32)
    o_ref[...] = (v + b3_ref[0]).astype(o_ref.dtype)


def prepare_critic_params(params, in_dim, hidden_dim, lane_align=None):
    """One-time prep: transpose to (in, out) layout, zero-pad the *hidden*
    feature dims (lane axis), cast matmul weights to bf16.  Zero padding is
    exact: padded hidden units stay at relu(0 + 0) = 0 through every layer and
    hit zero entries of w3.  The input feature dim is NOT padded -- the kernel
    contracts over the true in_dim (Mosaic pads the contraction internally)."""
    w1, b1, w2, b2, w3, b3 = params
    if lane_align is None:
        # 256-align for the 2x256^2 MXUs (v6e/v7x) when hidden is large enough;
        # 128 is already optimal for v5e's 4x128^2 MXU and for small hidden.
        lane_align = 256 if hidden_dim >= 256 else 128
    hid_pad = _round_up(hidden_dim, lane_align)
    pad_h = hid_pad - hidden_dim

    w1p = jnp.pad(w1.T, ((0, 0), (0, pad_h))).astype(jnp.bfloat16)       # (in_dim, hid_pad)
    w2p = jnp.pad(w2.T, ((0, pad_h), (0, pad_h))).astype(jnp.bfloat16)   # (hid_pad, hid_pad)
    w3p = jnp.pad(w3, ((0, 0), (0, pad_h))).astype(jnp.bfloat16)         # (1, hid_pad)
    b1p = jnp.pad(b1, (0, pad_h)).reshape(1, hid_pad).astype(jnp.float32)
    b2p = jnp.pad(b2, (0, pad_h)).reshape(1, hid_pad).astype(jnp.float32)
    b3p = b3.reshape(1).astype(jnp.float32)                              # scalar -> SMEM
    return (w1p, b1p, w2p, b2p, w3p, b3p)


def _vmem_bytes(tb, in_dim, hid_pad):
    """Conservative VMEM estimate: weights/biases assumed double-buffered,
    pipelined x/out tiles, plus live f32/bf16 activations."""
    bf16, f32 = 2, 4
    weights = (in_dim * hid_pad + hid_pad * hid_pad + hid_pad) * bf16
    biases = 2 * hid_pad * f32
    x_buf = 2 * tb * in_dim * f32
    out_buf = 2 * tb * f32
    act = 2 * tb * hid_pad * (f32 + bf16)
    return 2 * (weights + biases) + x_buf + out_buf + act


def _pick_tb(batch, in_dim, hid_pad, max_tb=1024, budget_bytes=48 << 20):
    """Largest batch tile (multiple of 128, <= max_tb) fitting the VMEM budget.
    48 MiB budget keeps the kernel inside v7x's 64 MiB per-TC VMEM."""
    tb = min(max_tb, max(128, _round_up(batch, 128)))
    while tb > 128 and _vmem_bytes(tb, in_dim, hid_pad) > budget_bytes:
        tb -= 128
    return tb


@functools.partial(jax.jit, static_argnames=("max_tb",))
def critic_forward(x, prepared, *, max_tb=1024):
    """x: (B, in_dim) float32.  Returns (B, 1) float32."""
    w1p, b1p, w2p, b2p, w3p, b3p = prepared
    B, in_dim = x.shape
    hid_pad = w1p.shape[1]

    TB = _pick_tb(B, in_dim, hid_pad, max_tb=max_tb)
    B_pad = _round_up(B, TB)
    if B_pad != B:
        # Only needed for a ragged last tile; "nice" batch sizes skip this pass.
        x = jnp.pad(x, ((0, B_pad - B), (0, 0)))
    num_tiles = B_pad // TB

    vmem_limit = int(max(32 << 20,
                         min(128 << 20, _vmem_bytes(TB, in_dim, hid_pad) + (8 << 20))))
    const2 = lambda i: (0, 0)

    out = pl.pallas_call(
        critic_kernel,
        out_shape=jax.ShapeDtypeStruct((1, B_pad), jnp.float32),
        grid=(num_tiles,),
        in_specs=[
            pl.BlockSpec((TB, in_dim), lambda i: (i, 0)),        # x (f32): pipelined tiles
            pl.BlockSpec((in_dim, hid_pad), const2),             # w1 (bf16): resident
            pl.BlockSpec((1, hid_pad), const2),                  # b1 (f32)
            pl.BlockSpec((hid_pad, hid_pad), const2),            # w2 (bf16)
            pl.BlockSpec((1, hid_pad), const2),                  # b2 (f32)
            pl.BlockSpec((1, hid_pad), const2),                  # w3 row (bf16)
            pl.BlockSpec(memory_space=pltpu.MemorySpace.SMEM),   # b3 scalar
        ],
        out_specs=pl.BlockSpec((1, TB), lambda i: (0, i)),       # lane-dense output row
        compiler_params=pltpu.CompilerParams(
            dimension_semantics=("parallel",),   # batch tiles shard across TCs on v7x
            vmem_limit_bytes=vmem_limit,
        ),
    )(x, w1p, b1p, w2p, b2p, w3p, b3p)
    return out.reshape(B_pad, 1)[:B]


def init_critic_params(key, in_dim, hidden_dim):
    """Deterministic PyTorch-style uniform(-1/sqrt(fan_in), 1/sqrt(fan_in)) init.
    Weight shapes follow nn.Linear: (out_features, in_features)."""
    ks = jax.random.split(key, 6)

    def lin(kw, kb, fan_in, fan_out):
        bound = 1.0 / jnp.sqrt(float(fan_in))
        w = jax.random.uniform(kw, (fan_out, fan_in), jnp.float32, -bound, bound)
        b = jax.random.uniform(kb, (fan_out,), jnp.float32, -bound, bound)
        return w, b

    w1, b1 = lin(ks[0], ks[1], in_dim, hidden_dim)
    w2, b2 = lin(ks[2], ks[3], hidden_dim, hidden_dim)
    w3, b3 = lin(ks[4], ks[5], hidden_dim, 1)
    return (w1, b1, w2, b2, w3, b3)


def critic_reference(x, params):
    w1, b1, w2, b2, w3, b3 = params
    h1 = jnp.maximum(x @ w1.T + b1, 0.0)
    h2 = jnp.maximum(h1 @ w2.T + b2, 0.0)
    return h2 @ w3.T + b3


if __name__ == "__main__":
    B, in_dim, hidden_dim = 2, 16, 32

    key = jax.random.PRNGKey(0)
    kx, kp = jax.random.split(key)
    x = jax.random.normal(kx, (B, in_dim), dtype=jnp.float32)
    params = init_critic_params(kp, in_dim, hidden_dim)

    prepared = prepare_critic_params(params, in_dim, hidden_dim)
    out = jax.block_until_ready(critic_forward(x, prepared))
    ref = critic_reference(x, params)

    assert out.shape == (B, 1), out.shape
    # bf16 activations/weights with f32 accumulation -> loosened tolerance.
    assert jnp.allclose(out, ref, atol=2e-2, rtol=2e-2), (out, ref)
    print("KERNEL_OK")
</pallas_src>

<mosaic_0001>
module attributes {stable_mosaic.version = 11 : i64} {
  func.func @critic_kernel(%arg0: i32, %arg1: memref<128x16xf32, #tpu.memory_space<vmem>>, %arg2: memref<16x128xbf16, #tpu.memory_space<vmem>>, %arg3: memref<1x128xf32, #tpu.memory_space<vmem>>, %arg4: memref<128x128xbf16, #tpu.memory_space<vmem>>, %arg5: memref<1x128xf32, #tpu.memory_space<vmem>>, %arg6: memref<1x128xbf16, #tpu.memory_space<vmem>>, %arg7: memref<1xf32, #tpu.memory_space<smem>>, %arg8: memref<1x128xf32, #tpu.memory_space<vmem>>) attributes {dimension_semantics = [#tpu.dimension_semantics<parallel>], iteration_bounds = array<i64: 1>, scalar_prefetch = 0 : i64, scratch_operands = 0 : i64, tpu.core_type = #tpu.core_type<tc>, window_params = [{transform_indices = @transform_0, window_bounds = array<i64: 128, 16>}, {pipeline_mode = #tpu.pipeline_mode<synchronous>, transform_indices = @transform_1, window_bounds = array<i64: 16, 128>}, {pipeline_mode = #tpu.pipeline_mode<synchronous>, transform_indices = @transform_2, window_bounds = array<i64: 1, 128>}, {pipeline_mode = #tpu.pipeline_mode<synchronous>, transform_indices = @transform_3, window_bounds = array<i64: 128, 128>}, {pipeline_mode = #tpu.pipeline_mode<synchronous>, transform_indices = @transform_4, window_bounds = array<i64: 1, 128>}, {pipeline_mode = #tpu.pipeline_mode<synchronous>, transform_indices = @transform_5, window_bounds = array<i64: 1, 128>}, {transform_indices = @transform_6, window_bounds = array<i64: 1>}, {transform_indices = @transform_7, window_bounds = array<i64: 1, 128>}]} {
    %c0 = arith.constant 0 : index
    %c0_0 = arith.constant 0 : index
    %0 = vector.load %arg1[%c0, %c0_0] : memref<128x16xf32, #tpu.memory_space<vmem>>, vector<128x16xf32>
    %1 = arith.truncf %0 : vector<128x16xf32> to vector<128x16xbf16>
    %c0_1 = arith.constant 0 : index
    %c0_2 = arith.constant 0 : index
    %2 = vector.load %arg2[%c0_1, %c0_2] : memref<16x128xbf16, #tpu.memory_space<vmem>>, vector<16x128xbf16>
    %cst = arith.constant dense<0.000000e+00> : vector<128x128xf32>
    %3 = tpu.matmul %1, %2, %cst {dimension_numbers = #tpu.dot_dimension_numbers<[1], [0], [0], [1], [0, 0, 1, 1], [], []>} : vector<128x16xbf16>, vector<16x128xbf16>, vector<128x128xf32> -> vector<128x128xf32>
    %c0_3 = arith.constant 0 : index
    %c0_4 = arith.constant 0 : index
    %4 = vector.load %arg3[%c0_3, %c0_4] : memref<1x128xf32, #tpu.memory_space<vmem>>, vector<1x128xf32>
    %5 = vector.broadcast %4 : vector<1x128xf32> to vector<128x128xf32>
    %6 = arith.addf %3, %5 : vector<128x128xf32>
    %cst_5 = arith.constant 0.000000e+00 : f32
    %7 = vector.broadcast %cst_5 : f32 to vector<128x128xf32>
    %8 = arith.maximumf %6, %7 : vector<128x128xf32>
    %9 = arith.truncf %8 : vector<128x128xf32> to vector<128x128xbf16>
    %c0_6 = arith.constant 0 : index
    %c0_7 = arith.constant 0 : index
    %10 = vector.load %arg4[%c0_6, %c0_7] : memref<128x128xbf16, #tpu.memory_space<vmem>>, vector<128x128xbf16>
    %cst_8 = arith.constant dense<0.000000e+00> : vector<128x128xf32>
    %11 = tpu.matmul %9, %10, %cst_8 {dimension_numbers = #tpu.dot_dimension_numbers<[1], [0], [0], [1], [0, 0, 1, 1], [], []>} : vector<128x128xbf16>, vector<128x128xbf16>, vector<128x128xf32> -> vector<128x128xf32>
    %c0_9 = arith.constant 0 : index
    %c0_10 = arith.constant 0 : index
    %12 = vector.load %arg5[%c0_9, %c0_10] : memref<1x128xf32, #tpu.memory_space<vmem>>, vector<1x128xf32>
    %13 = vector.broadcast %12 : vector<1x128xf32> to vector<128x128xf32>
    %14 = arith.addf %11, %13 : vector<128x128xf32>
    %cst_11 = arith.constant 0.000000e+00 : f32
    %15 = vector.broadcast %cst_11 : f32 to vector<128x128xf32>
    %16 = arith.maximumf %14, %15 : vector<128x128xf32>
    %c0_12 = arith.constant 0 : index
    %c0_13 = arith.constant 0 : index
    %17 = vector.load %arg6[%c0_12, %c0_13] : memref<1x128xbf16, #tpu.memory_space<vmem>>, vector<1x128xbf16>
    %18 = arith.truncf %16 : vector<128x128xf32> to vector<128x128xbf16>
    %cst_14 = arith.constant dense<0.000000e+00> : vector<1x128xf32>
    %19 = tpu.matmul %17, %18, %cst_14 {dimension_numbers = #tpu.dot_dimension_numbers<[1], [1], [0], [0], [0, 0, 1, 0], [], []>} : vector<1x128xbf16>, vector<128x128xbf16>, vector<1x128xf32> -> vector<1x128xf32>
    %c0_15 = arith.constant 0 : index
    %20 = memref.load %arg7[%c0_15] : memref<1xf32, #tpu.memory_space<smem>>
    %21 = vector.broadcast %20 : f32 to vector<1x128xf32>
    %22 = arith.addf %19, %21 : vector<1x128xf32>
    %c0_16 = arith.constant 0 : index
    %c0_17 = arith.constant 0 : index
    %23 = vector.load %arg8[%c0_16, %c0_17] : memref<1x128xf32, #tpu.memory_space<vmem>>, vector<1x128xf32>
    tpu.vector_store %arg8[%c0_16, %c0_17], %22 {strides = array<i32>} : memref<1x128xf32, #tpu.memory_space<vmem>>, vector<1x128xf32>,
    return
  }
  func.func @transform_0(%arg0: i32) -> (i32, i32) {
    %c0_i32 = arith.constant 0 : i32
    %c0_i32_0 = arith.constant 0 : i32
    return %arg0, %c0_i32 : i32, i32
  }
  func.func @transform_1(%arg0: i32) -> (i32, i32) {
    %c0_i32 = arith.constant 0 : i32
    %c0_i32_0 = arith.constant 0 : i32
    %c0_i32_1 = arith.constant 0 : i32
    return %c0_i32, %c0_i32_0 : i32, i32
  }
  func.func @transform_2(%arg0: i32) -> (i32, i32) {
    %c0_i32 = arith.constant 0 : i32
    %c0_i32_0 = arith.constant 0 : i32
    %c0_i32_1 = arith.constant 0 : i32
    return %c0_i32, %c0_i32_0 : i32, i32
  }
  func.func @transform_3(%arg0: i32) -> (i32, i32) {
    %c0_i32 = arith.constant 0 : i32
    %c0_i32_0 = arith.constant 0 : i32
    %c0_i32_1 = arith.constant 0 : i32
    return %c0_i32, %c0_i32_0 : i32, i32
  }
  func.func @transform_4(%arg0: i32) -> (i32, i32) {
    %c0_i32 = arith.constant 0 : i32
    %c0_i32_0 = arith.constant 0 : i32
    %c0_i32_1 = arith.constant 0 : i32
    return %c0_i32, %c0_i32_0 : i32, i32
  }
  func.func @transform_5(%arg0: i32) -> (i32, i32) {
    %c0_i32 = arith.constant 0 : i32
    %c0_i32_0 = arith.constant 0 : i32
    %c0_i32_1 = arith.constant 0 : i32
    return %c0_i32, %c0_i32_0 : i32, i32
  }
  func.func @transform_6(%arg0: i32) -> i32 {
    %c0_i32 = arith.constant 0 : i32
    %c0_i32_0 = arith.constant 0 : i32
    return %c0_i32 : i32
  }
  func.func @transform_7(%arg0: i32) -> (i32, i32) {
    %c0_i32 = arith.constant 0 : i32
    %c0_i32_0 = arith.constant 0 : i32
    return %c0_i32, %arg0 : i32, i32
  }
}

</mosaic_0001>

<llo_original>
// kernel: critic_forward.1
$region0: #{critic_forward.1}
  #allocation0 [shape = 'u32[]', space=smem, size = 0x4, offset = 0x4, fixed_abs, tag = 'smem constant byte address 0x4 - core index']
  #allocation1 [shape = 'u32[72,128]{1,0:T(1,128)}', space=vmem, size = 0x9000, scoped, tag = 'internal scratch']
  #allocation2 [shape = 'f32[1]{0:T(128)S(6)}', space=smem, size = 0x200, scoped, tag = 'scoped memory for critic_forward.1']
  %s0 = inlined_call_operand.vmem [shape: f32[128,16], index: 0, kind: input, shape index: {}]
  %s1 = inlined_call_operand.vmem [shape: bf16[16,128], index: 1, kind: input, shape index: {}]
  %s2 = inlined_call_operand.vmem [shape: f32[1,128], index: 2, kind: input, shape index: {}]
  %s3 = inlined_call_operand.vmem [shape: bf16[128,128], index: 3, kind: input, shape index: {}]
  %s4 = inlined_call_operand.vmem [shape: f32[1,128], index: 4, kind: input, shape index: {}]
  %s5 = inlined_call_operand.vmem [shape: bf16[1,128], index: 5, kind: input, shape index: {}]
  %s6 = inlined_call_operand.<no memory space> [shape: f32[1], index: 6, kind: input, shape index: {}]
  %s7 = inlined_call_operand.vmem [shape: f32[1,128], index: 7, kind: output, shape index: {}]
  %s8 = sld [smem:[#allocation0]]
  $region38: #{critic_forward.1} parent=0
    _
  %s10 = ssub.s32 1, %s8
  %s11 = scalar_select 0, %s10, %s8
  %12 = sst [smem:[#allocation2]] %s6
  // Predicated region
  $region2: #{critic_forward.1} parent=0 // pred_check
    _
  $region3: #{critic_forward.1} parent=0 // pred_check_branch
    %14 = sbr.rel (0) target = $region5
  $region4: #{critic_forward.1} parent=0 // pred_region
    _
  $region5: #{critic_forward.1} parent=0 // pred_fallthru
    _
  // Predicated region
  $region6: #{critic_forward.1} parent=0 // pred_check
    _
  $region7: #{critic_forward.1} parent=0 // pred_check_branch
    %16 = sbr.rel (0) target = $region9
  $region8: #{critic_forward.1} parent=0 // pred_region
    _
  $region9: #{critic_forward.1} parent=0 // pred_fallthru
    _
  // Predicated region
  $region10: #{critic_forward.1} parent=0 // pred_check
    _
  $region11: #{critic_forward.1} parent=0 // pred_check_branch
    %18 = sbr.rel (0) target = $region13
  $region12: #{critic_forward.1} parent=0 // pred_region
    _
  $region13: #{critic_forward.1} parent=0 // pred_fallthru
    _
  // Predicated region
  $region14: #{critic_forward.1} parent=0 // pred_check
    _
  $region15: #{critic_forward.1} parent=0 // pred_check_branch
    %20 = sbr.rel (0) target = $region17
  $region16: #{critic_forward.1} parent=0 // pred_region
    _
  $region17: #{critic_forward.1} parent=0 // pred_fallthru
    _
  // Predicated region
  $region18: #{critic_forward.1} parent=0 // pred_check
    _
  $region19: #{critic_forward.1} parent=0 // pred_check_branch
    %22 = sbr.rel (0) target = $region21
  $region20: #{critic_forward.1} parent=0 // pred_region
    _
  $region21: #{critic_forward.1} parent=0 // pred_fallthru
    _
  // Predicated region
  $region22: #{critic_forward.1} parent=0 // pred_check
    _
  $region23: #{critic_forward.1} parent=0 // pred_check_branch
    %24 = sbr.rel (0) target = $region25
  $region24: #{critic_forward.1} parent=0 // pred_region
    _
  $region25: #{critic_forward.1} parent=0 // pred_fallthru
    _
  // Predicated region
  $region26: #{critic_forward.1} parent=0 // pred_check
    _
  $region27: #{critic_forward.1} parent=0 // pred_check_branch
    %26 = sbr.rel (0) target = $region29
  $region28: #{critic_forward.1} parent=0 // pred_region
    _
  $region29: #{critic_forward.1} parent=0 // pred_fallthru
    _
  %v28 = vld [vmem:[%s0] sm:$0xff]
  %v29 = vld [vmem:[%s0 + $0x8] sm:$0xff]
  %v30 = vld [vmem:[%s0 + $0x10] sm:$0xff]
  %v31 = vld [vmem:[%s0 + $0x18] sm:$0xff]
  %v32 = vld [vmem:[%s0 + $0x20] sm:$0xff]
  %v33 = vld [vmem:[%s0 + $0x28] sm:$0xff]
  %v34 = vld [vmem:[%s0 + $0x30] sm:$0xff]
  %v35 = vld [vmem:[%s0 + $0x38] sm:$0xff]
  %v36 = vld [vmem:[%s0 + $0x40] sm:$0xff]
  %v37 = vld [vmem:[%s0 + $0x48] sm:$0xff]
  %v38 = vld [vmem:[%s0 + $0x50] sm:$0xff]
  %v39 = vld [vmem:[%s0 + $0x58] sm:$0xff]
  %v40 = vld [vmem:[%s0 + $0x60] sm:$0xff]
  %v41 = vld [vmem:[%s0 + $0x68] sm:$0xff]
  %v42 = vld [vmem:[%s0 + $0x70] sm:$0xff]
  %v43 = vld [vmem:[%s0 + $0x78] sm:$0xff]
  %v44 = vpack.c.bf16 %v29, %v28
  %v45 = vpack.c.bf16 %v31, %v30
  %v46 = vpack.c.bf16 %v33, %v32
  %v47 = vpack.c.bf16 %v35, %v34
  %v48 = vpack.c.bf16 %v37, %v36
  %v49 = vpack.c.bf16 %v39, %v38
  %v50 = vpack.c.bf16 %v41, %v40
  %v51 = vpack.c.bf16 %v43, %v42
  %v52 = vld [vmem:[%s1] sm:$0xf]
  %v53 = vld [vmem:[%s1 + $0x4] sm:$0xf]
  %v54 = vld [vmem:[%s2] sm:$0x1]
  %v56 = vperm.slane %v54, 0
  %v60 = vunpack.c.l.b16 %v52
  %v61 = vunpack.c.l.b16 %v53
  %v62 = vpack.c.b16 %v61, %v60
  %vm64 = vcmask 130048
  %v66 = vsel %vm64, %v44, 0
  %v69 = vsel %vm64, %v45, 0
  %v72 = vsel %vm64, %v46, 0
  %v75 = vsel %vm64, %v47, 0
  %v78 = vsel %vm64, %v48, 0
  %v81 = vsel %vm64, %v49, 0
  %v84 = vsel %vm64, %v50, 0
  %v87 = vsel %vm64, %v51, 0
  %89 = vmatpush.bf16.msra.mxu0 0
  %90 = vmatpush.bf16.msra.mxu0 0
  %91 = vmatpush.bf16.msra.mxu0 0
  %92 = vmatpush.bf16.msra.mxu0 0
  %93 = vmatpush.bf16.msra.mxu0 0
  %94 = vmatpush.bf16.msra.mxu0 0
  %95 = vmatpush.bf16.msra.mxu0 0
  %96 = vmatpush.bf16.msra.mxu0 %v62
  %97 = vmatmul.bf16.gmra.mxu0 %v66
  %v98 = vpop.f32.mrf.mxu0
  %v99 = vadd.f32 %v56, %v98
  %v100 = vpop.f32.mrf.mxu0
  %v101 = vadd.f32 %v56, %v100
  %102 = vmatmul.bf16.gmra.mxu0 %v69
  %v103 = vpop.f32.mrf.mxu0
  %v104 = vadd.f32 %v56, %v103
  %v105 = vpop.f32.mrf.mxu0
  %v106 = vadd.f32 %v56, %v105
  %107 = vmatmul.bf16.gmra.mxu0 %v72
  %v108 = vpop.f32.mrf.mxu0
  %v109 = vadd.f32 %v56, %v108
  %v110 = vpop.f32.mrf.mxu0
  %v111 = vadd.f32 %v56, %v110
  %112 = vmatmul.bf16.gmra.mxu0 %v75
  %v113 = vpop.f32.mrf.mxu0
  %v114 = vadd.f32 %v56, %v113
  %v115 = vpop.f32.mrf.mxu0
  %v116 = vadd.f32 %v56, %v115
  %117 = vmatmul.bf16.gmra.mxu0 %v78
  %v118 = vpop.f32.mrf.mxu0
  %v119 = vadd.f32 %v56, %v118
  %v120 = vpop.f32.mrf.mxu0
  %v121 = vadd.f32 %v56, %v120
  %122 = vmatmul.bf16.gmra.mxu0 %v81
  %v123 = vpop.f32.mrf.mxu0
  %v124 = vadd.f32 %v56, %v123
  %v125 = vpop.f32.mrf.mxu0
  %v126 = vadd.f32 %v56, %v125
  %127 = vmatmul.bf16.gmra.mxu0 %v84
  %v128 = vpop.f32.mrf.mxu0
  %v129 = vadd.f32 %v56, %v128
  %v130 = vpop.f32.mrf.mxu0
  %v131 = vadd.f32 %v56, %v130
  %132 = vmatmul.bf16.gmra.mxu0 %v87
  %v133 = vpop.f32.mrf.mxu0
  %v134 = vadd.f32 %v56, %v133
  %v135 = vpop.f32.mrf.mxu0
  %v136 = vadd.f32 %v56, %v135
  %137 = vdwg.mxu0
  %v138 = vmax.f32 %v99, 0.0
  %v139 = vmax.f32 %v101, 0.0
  %v140 = vmax.f32 %v104, 0.0
  %v141 = vmax.f32 %v106, 0.0
  %v142 = vmax.f32 %v109, 0.0
  %v143 = vmax.f32 %v111, 0.0
  %v144 = vmax.f32 %v114, 0.0
  %v145 = vmax.f32 %v116, 0.0
  %v146 = vmax.f32 %v119, 0.0
  %v147 = vmax.f32 %v121, 0.0
  %v148 = vmax.f32 %v124, 0.0
  %v149 = vmax.f32 %v126, 0.0
  %v150 = vmax.f32 %v129, 0.0
  %v151 = vmax.f32 %v131, 0.0
  %v152 = vmax.f32 %v134, 0.0
  %v153 = vmax.f32 %v136, 0.0
  %v154 = vpack.c.bf16 %v139, %v138
  %v155 = vpack.c.bf16 %v141, %v140
  %v156 = vpack.c.bf16 %v143, %v142
  %v157 = vpack.c.bf16 %v145, %v144
  %v158 = vpack.c.bf16 %v147, %v146
  %v159 = vpack.c.bf16 %v149, %v148
  %v160 = vpack.c.bf16 %v151, %v150
  %v161 = vpack.c.bf16 %v153, %v152
  %v162 = vld [vmem:[%s3] sm:$0xf]
  %v163 = vld [vmem:[%s3 + $0x4] sm:$0xf]
  %v164 = vld [vmem:[%s3 + $0x8] sm:$0xf]
  %v165 = vld [vmem:[%s3 + $0xc] sm:$0xf]
  %v166 = vld [vmem:[%s3 + $0x10] sm:$0xf]
  %v167 = vld [vmem:[%s3 + $0x14] sm:$0xf]
  %v168 = vld [vmem:[%s3 + $0x18] sm:$0xf]
  %v169 = vld [vmem:[%s3 + $0x1c] sm:$0xf]
  %v170 = vld [vmem:[%s3 + $0x20] sm:$0xf]
  %v171 = vld [vmem:[%s3 + $0x24] sm:$0xf]
  %v172 = vld [vmem:[%s3 + $0x28] sm:$0xf]
  %v173 = vld [vmem:[%s3 + $0x2c] sm:$0xf]
  %v174 = vld [vmem:[%s3 + $0x30] sm:$0xf]
  %v175 = vld [vmem:[%s3 + $0x34] sm:$0xf]
  %v176 = vld [vmem:[%s3 + $0x38] sm:$0xf]
  %v177 = vld [vmem:[%s3 + $0x3c] sm:$0xf]
  %v178 = vld [vmem:[%s4] sm:$0x1]
  %v180 = vperm.slane %v178, 0
  %v198 = vunpack.c.l.b16 %v162
  %v199 = vunpack.c.l.b16 %v163
  %v200 = vunpack.c.l.b16 %v164
  %v201 = vunpack.c.l.b16 %v165
  %v202 = vunpack.c.l.b16 %v166
  %v203 = vunpack.c.l.b16 %v167
  %v204 = vunpack.c.l.b16 %v168
  %v205 = vunpack.c.l.b16 %v169
  %v206 = vunpack.c.l.b16 %v170
  %v207 = vunpack.c.l.b16 %v171
  %v208 = vunpack.c.l.b16 %v172
  %v209 = vunpack.c.l.b16 %v173
  %v210 = vunpack.c.l.b16 %v174
  %v211 = vunpack.c.l.b16 %v175
  %v212 = vunpack.c.l.b16 %v176
  %v213 = vunpack.c.l.b16 %v177
  %v214 = vpack.c.b16 %v199, %v198
  %v215 = vpack.c.b16 %v201, %v200
  %v216 = vpack.c.b16 %v203, %v202
  %v217 = vpack.c.b16 %v205, %v204
  %v218 = vpack.c.b16 %v207, %v206
  %v219 = vpack.c.b16 %v209, %v208
  %v220 = vpack.c.b16 %v211, %v210
  %v221 = vpack.c.b16 %v213, %v212
  %230 = vmatpush.bf16.msra.mxu0 %v221
  %231 = vmatpush.bf16.msra.mxu0 %v220
  %232 = vmatpush.bf16.msra.mxu0 %v219
  %233 = vmatpush.bf16.msra.mxu0 %v218
  %234 = vmatpush.bf16.msra.mxu0 %v217
  %235 = vmatpush.bf16.msra.mxu0 %v216
  %236 = vmatpush.bf16.msra.mxu0 %v215
  %237 = vmatpush.bf16.msra.mxu0 %v214
  %238 = vmatmul.bf16.gmra.mxu0 %v154
  %v239 = vpop.f32.mrf.mxu0
  %v240 = vadd.f32 %v180, %v239
  %v241 = vpop.f32.mrf.mxu0
  %v242 = vadd.f32 %v180, %v241
  %243 = vmatmul.bf16.gmra.mxu0 %v155
  %v244 = vpop.f32.mrf.mxu0
  %v245 = vadd.f32 %v180, %v244
  %v246 = vpop.f32.mrf.mxu0
  %v247 = vadd.f32 %v180, %v246
  %248 = vmatmul.bf16.gmra.mxu0 %v156
  %v249 = vpop.f32.mrf.mxu0
  %v250 = vadd.f32 %v180, %v249
  %v251 = vpop.f32.mrf.mxu0
  %v252 = vadd.f32 %v180, %v251
  %253 = vmatmul.bf16.gmra.mxu0 %v157
  %v254 = vpop.f32.mrf.mxu0
  %v255 = vadd.f32 %v180, %v254
  %v256 = vpop.f32.mrf.mxu0
  %v257 = vadd.f32 %v180, %v256
  %258 = vmatmul.bf16.gmra.mxu0 %v158
  %v259 = vpop.f32.mrf.mxu0
  %v260 = vadd.f32 %v180, %v259
  %v261 = vpop.f32.mrf.mxu0
  %v262 = vadd.f32 %v180, %v261
  %263 = vmatmul.bf16.gmra.mxu0 %v159
  %v264 = vpop.f32.mrf.mxu0
  %v265 = vadd.f32 %v180, %v264
  %v266 = vpop.f32.mrf.mxu0
  %v267 = vadd.f32 %v180, %v266
  %268 = vmatmul.bf16.gmra.mxu0 %v160
  %v269 = vpop.f32.mrf.mxu0
  %v270 = vadd.f32 %v180, %v269
  %v271 = vpop.f32.mrf.mxu0
  %v272 = vadd.f32 %v180, %v271
  %273 = vmatmul.bf16.gmra.mxu0 %v161
  %v274 = vpop.f32.mrf.mxu0
  %v275 = vadd.f32 %v180, %v274
  %v276 = vpop.f32.mrf.mxu0
  %v277 = vadd.f32 %v180, %v276
  %278 = vdwg.mxu0
  %v279 = vmax.f32 %v240, 0.0
  %v280 = vmax.f32 %v242, 0.0
  %v281 = vmax.f32 %v245, 0.0
  %v282 = vmax.f32 %v247, 0.0
  %v283 = vmax.f32 %v250, 0.0
  %v284 = vmax.f32 %v252, 0.0
  %v285 = vmax.f32 %v255, 0.0
  %v286 = vmax.f32 %v257, 0.0
  %v287 = vmax.f32 %v260, 0.0
  %v288 = vmax.f32 %v262, 0.0
  %v289 = vmax.f32 %v265, 0.0
  %v290 = vmax.f32 %v267, 0.0
  %v291 = vmax.f32 %v270, 0.0
  %v292 = vmax.f32 %v272, 0.0
  %v293 = vmax.f32 %v275, 0.0
  %v294 = vmax.f32 %v277, 0.0
  %v295 = vld [vmem:[%s5] sm:$0x1]
  %v296 = vpack.c.bf16 %v280, %v279
  %v297 = vpack.c.bf16 %v282, %v281
  %v298 = vpack.c.bf16 %v284, %v283
  %v299 = vpack.c.bf16 %v286, %v285
  %v300 = vpack.c.bf16 %v288, %v287
  %v301 = vpack.c.bf16 %v290, %v289
  %v302 = vpack.c.bf16 %v292, %v291
  %v303 = vpack.c.bf16 %v294, %v293
  %s304 = sld [smem:[#allocation2]]
  %v305 = vstv %s304
  %306 = vmatpush.bf16.xpose.msra.mxu0 %v303
  %307 = vmatpush.bf16.xpose.msra.mxu0 %v302
  %308 = vmatpush.bf16.xpose.msra.mxu0 %v301
  %309 = vmatpush.bf16.xpose.msra.mxu0 %v300
  %310 = vmatpush.bf16.xpose.msra.mxu0 %v299
  %311 = vmatpush.bf16.xpose.msra.mxu0 %v298
  %312 = vmatpush.bf16.xpose.msra.mxu0 %v297
  %313 = vmatpush.bf16.xpose.msra.mxu0 %v296
  %314 = vmatmul.bf16.gmra.mxu0 %v295
  %v315 = vpop.f32.mrf.mxu0
  %v316 = vadd.f32 %v305, %v315
  %v317 = vpop.f32.mrf.mxu0
  %318 = vdwg.mxu0
  %319 = vst [vmem:[%s7] sm:$0x1] %v316
  // Predicated region
  $region30: #{critic_forward.1} parent=0 // pred_check
    _
  $region31: #{critic_forward.1} parent=0 // pred_check_branch
    %321 = sbr.rel (0) target = $region33
  $region32: #{critic_forward.1} parent=0 // pred_region
    _
  $region33: #{critic_forward.1} parent=0 // pred_fallthru
    _
  // Predicated region
  $region34: #{critic_forward.1} parent=0 // pred_check
    _
  $region35: #{critic_forward.1} parent=0 // pred_check_branch
    %323 = sbr.rel (0) target = $region37
  $region36: #{critic_forward.1} parent=0 // pred_region
    _
  $region37: #{critic_forward.1} parent=0 // pred_fallthru
    _

</llo_original>
